<compile_context>
chip_gen: v7x
topology: tpu7x:2x2x1
jax: 0.10.0
libtpu: 0.0.40
codegen_flags: <defaults>
</compile_context>

<pallas_src>
import functools
import math

import jax
import jax.numpy as jnp
from jax.experimental import pallas as pl
from jax.experimental.pallas import tpu as pltpu

_HALF_PI = math.pi / 2.0
_HIGHEST = jax.lax.Precision.HIGHEST


def _round_up(x, m):
    return ((x + m - 1) // m) * m


def _complex_linear(xr_ref, xi_ref, wt_ref, wb_ref, b_ref):
    # lin = [lin_r | lin_i] = x_r @ [wr^T|wi^T] + x_i @ [-wi^T|wr^T] + [b_r|b_i]
    return (jnp.dot(xr_ref[...], wt_ref[...],
                    preferred_element_type=jnp.float32, precision=_HIGHEST)
            + jnp.dot(xi_ref[...], wb_ref[...],
                      preferred_element_type=jnp.float32, precision=_HIGHEST)
            + b_ref[...])


def wire_kernel_packed(xr_ref, xi_ref, wt_ref, wb_ref, b_ref, o_ref, *,
                       omega0, scale0, out_pad):
    """out_f <= 64 path: one packed [real | imag] slab of width 2*out_pad (=128)."""
    lin = _complex_linear(xr_ref, xi_ref, wt_ref, wb_ref, b_ref)  # [lin_r | lin_i]
    rolled = pltpu.roll(lin, shift=out_pad, axis=1)               # [lin_i | lin_r] (XLU)
    lane = jax.lax.broadcasted_iota(jnp.int32, lin.shape, 1)
    first = lane < out_pad
    r_slab = jnp.where(first, lin, rolled)                        # [lin_r | lin_r] (VPU)
    i_slab = jnp.where(first, rolled, lin)                        # [lin_i | lin_i] (VPU)
    s2 = scale0 * scale0
    mag = jnp.exp(-omega0 * i_slab - s2 * (r_slab * r_slab + i_slab * i_slab))
    # cos(x) = sin(x + pi/2): one sin over the whole slab instead of cos + sin.
    phase = omega0 * r_slab + jnp.where(first, _HALF_PI, 0.0)
    o_ref[...] = mag * jnp.sin(phase)


def wire_kernel_split(xr_ref, xi_ref, wt_ref, wb_ref, b_ref, or_ref, oi_ref, *,
                      omega0, scale0, out_pad):
    """out_f > 64 path: out_pad is a multiple of 128, so both halves are
    lane-aligned and each output is stored lane-dense (no concat, no split)."""
    lin = _complex_linear(xr_ref, xi_ref, wt_ref, wb_ref, b_ref)
    lin_r = lin[:, :out_pad]
    lin_i = lin[:, out_pad:]
    s2 = scale0 * scale0
    mag = jnp.exp(-omega0 * lin_i - s2 * (lin_r * lin_r + lin_i * lin_i))
    phase = omega0 * lin_r
    or_ref[...] = mag * jnp.cos(phase)
    oi_ref[...] = mag * jnp.sin(phase)


@functools.partial(jax.jit, static_argnames=("omega0", "scale0", "tile_n"))
def wire_layer(x_r, x_i, w_r, w_i, b_r, b_i, *, omega0, scale0, tile_n=512):
    # NOTE: on v5e (16 MiB default scoped VMEM, 1 vst slot) prefer tile_n=256.
    N, in_f = x_r.shape
    out_f = w_r.shape[0]
    omega0 = float(omega0)
    scale0 = float(scale0)

    use_slab = out_f <= 64
    out_pad = 64 if use_slab else _round_up(out_f, 128)

    # One-time wrapper-side padding + packing / pre-transpose of the weights.
    if out_pad != out_f:
        w_r = jnp.pad(w_r, ((0, out_pad - out_f), (0, 0)))
        w_i = jnp.pad(w_i, ((0, out_pad - out_f), (0, 0)))
        b_r = jnp.pad(b_r, (0, out_pad - out_f))
        b_i = jnp.pad(b_i, (0, out_pad - out_f))
    w_top = jnp.concatenate([w_r.T, w_i.T], axis=-1)       # (in_f, 2*out_pad)
    w_bot = jnp.concatenate([-w_i.T, w_r.T], axis=-1)      # (in_f, 2*out_pad)
    b_big = jnp.concatenate([b_r, b_i])[None, :]            # (1,   2*out_pad)

    # Row tiling: >= 2 grid steps for N > 8 (v7x megacore + DMA/compute overlap),
    # tile a multiple of 8 sublanes, ragged N handled by padding (rows sliced off).
    num_tiles = max(pl.cdiv(N, tile_n), 2)
    tile = max(8, _round_up(pl.cdiv(N, num_tiles), 8))
    n_pad = _round_up(N, tile)
    grid = (n_pad // tile,)
    if n_pad != N:
        x_r = jnp.pad(x_r, ((0, n_pad - N), (0, 0)))
        x_i = jnp.pad(x_i, ((0, n_pad - N), (0, 0)))

    kernel_fn = wire_kernel_packed if use_slab else wire_kernel_split
    kernel = functools.partial(kernel_fn, omega0=omega0, scale0=scale0,
                               out_pad=out_pad)

    in_specs = [
        pl.BlockSpec((tile, in_f), lambda i: (i, 0)),                 # x_r rows
        pl.BlockSpec((tile, in_f), lambda i: (i, 0)),                 # x_i rows
        pl.BlockSpec((in_f, 2 * out_pad), lambda i: (0, 0),
                     pipeline_mode=pl.Buffered(1)),                   # resident W top
        pl.BlockSpec((in_f, 2 * out_pad), lambda i: (0, 0),
                     pipeline_mode=pl.Buffered(1)),                   # resident W bot
        pl.BlockSpec((1, 2 * out_pad), lambda i: (0, 0),
                     pipeline_mode=pl.Buffered(1)),                   # resident bias
    ]
    if use_slab:
        out_specs = pl.BlockSpec((tile, 2 * out_pad), lambda i: (i, 0))
        out_shape = jax.ShapeDtypeStruct((n_pad, 2 * out_pad), jnp.float32)
    else:
        out_specs = [pl.BlockSpec((tile, out_pad), lambda i: (i, 0)),
                     pl.BlockSpec((tile, out_pad), lambda i: (i, 0))]
        out_shape = [jax.ShapeDtypeStruct((n_pad, out_pad), jnp.float32),
                     jax.ShapeDtypeStruct((n_pad, out_pad), jnp.float32)]

    # Explicit scoped-VMEM budget: 2x double-buffered x blocks, single-buffered
    # weights/bias, double-buffered output blocks, plus slack for temporaries.
    x_blk = tile * in_f * 4
    w_bytes = (w_top.size + w_bot.size + b_big.size) * 4
    out_blk = tile * 2 * out_pad * 4
    vmem_limit = int(min(max(2 * 2 * x_blk + w_bytes + 2 * out_blk + (8 << 20),
                             32 << 20), 64 << 20))

    n_trans = (2 if use_slab else 3)
    cost = pl.CostEstimate(
        flops=2 * 2 * n_pad * in_f * (2 * out_pad) + 12 * n_pad * 2 * out_pad,
        transcendentals=n_trans * n_pad * (2 * out_pad if use_slab else out_pad),
        bytes_accessed=4 * (2 * n_pad * in_f + w_top.size + w_bot.size
                            + b_big.size + n_pad * 2 * out_pad),
    )

    result = pl.pallas_call(
        kernel,
        grid=grid,
        in_specs=in_specs,
        out_specs=out_specs,
        out_shape=out_shape,
        compiler_params=pltpu.CompilerParams(
            dimension_semantics=("parallel",),
            vmem_limit_bytes=vmem_limit),
        cost_estimate=cost,
    )(x_r, x_i, w_top, w_bot, b_big)

    if use_slab:
        out_r = result[:N, :out_f]
        out_i = result[:N, out_pad:out_pad + out_f]
    else:
        out_r = result[0][:N, :out_f]
        out_i = result[1][:N, :out_f]
    return out_r, out_i


def wire_reference(x_r, x_i, w_r, w_i, b_r, b_i, omega0, scale0):
    lin_r = (jnp.dot(x_r, w_r.T, precision=_HIGHEST)
             - jnp.dot(x_i, w_i.T, precision=_HIGHEST) + b_r[None, :])
    lin_i = (jnp.dot(x_r, w_i.T, precision=_HIGHEST)
             + jnp.dot(x_i, w_r.T, precision=_HIGHEST) + b_i[None, :])
    exp_re = -omega0 * lin_i - (scale0 ** 2) * (lin_r ** 2 + lin_i ** 2)
    exp_im = omega0 * lin_r
    return jnp.exp(exp_re) * jnp.cos(exp_im), jnp.exp(exp_re) * jnp.sin(exp_im)


if __name__ == "__main__":
    # Small shapes consistent with an implicit-representation MLP layer:
    # batch=2, seq=8 coordinates -> N=16 rows, in_features=32, out_features=48.
    batch, seq, in_features, out_features = 2, 8, 32, 48
    omega_0 = 30.0
    sigma_0 = 10.0

    key = jax.random.PRNGKey(0)
    kxr, kxi, kwr, kwi, kbr, kbi = jax.random.split(key, 6)

    # Deterministic synthetic parameters (nn.Linear-like uniform init scale).
    bound = 1.0 / math.sqrt(in_features)
    w_r = jax.random.uniform(kwr, (out_features, in_features), jnp.float32, -bound, bound)
    w_i = jax.random.uniform(kwi, (out_features, in_features), jnp.float32, -bound, bound)
    b_r = jax.random.uniform(kbr, (out_features,), jnp.float32, -bound, bound)
    b_i = jax.random.uniform(kbi, (out_features,), jnp.float32, -bound, bound)

    # Complex input (is_first=False branch); small magnitude so the Gabor
    # Gaussian term does not flush everything to zero.
    x_r = 0.1 * jax.random.normal(kxr, (batch, seq, in_features), jnp.float32)
    x_i = 0.1 * jax.random.normal(kxi, (batch, seq, in_features), jnp.float32)

    xr2 = x_r.reshape(batch * seq, in_features)
    xi2 = x_i.reshape(batch * seq, in_features)

    # ---- out_features <= 64 (packed-slab kernel path) ----
    out_r, out_i = wire_layer(xr2, xi2, w_r, w_i, b_r, b_i,
                              omega0=omega_0, scale0=sigma_0)
    jax.block_until_ready((out_r, out_i))
    ref_r, ref_i = wire_reference(xr2, xi2, w_r, w_i, b_r, b_i, omega_0, sigma_0)
    assert out_r.shape == (batch * seq, out_features)
    assert jnp.max(jnp.abs(out_r - ref_r)) < 2e-4
    assert jnp.max(jnp.abs(out_i - ref_i)) < 2e-4

    # ---- out_features > 64 (lane-aligned split-output kernel path) ----
    out_features2 = 160
    kwr2, kwi2, kbr2, kbi2 = jax.random.split(jax.random.PRNGKey(1), 4)
    w_r2 = jax.random.uniform(kwr2, (out_features2, in_features), jnp.float32, -bound, bound)
    w_i2 = jax.random.uniform(kwi2, (out_features2, in_features), jnp.float32, -bound, bound)
    b_r2 = jax.random.uniform(kbr2, (out_features2,), jnp.float32, -bound, bound)
    b_i2 = jax.random.uniform(kbi2, (out_features2,), jnp.float32, -bound, bound)
    out_r2, out_i2 = wire_layer(xr2, xi2, w_r2, w_i2, b_r2, b_i2,
                                omega0=omega_0, scale0=sigma_0)
    jax.block_until_ready((out_r2, out_i2))
    ref_r2, ref_i2 = wire_reference(xr2, xi2, w_r2, w_i2, b_r2, b_i2, omega_0, sigma_0)
    assert out_r2.shape == (batch * seq, out_features2)
    assert jnp.max(jnp.abs(out_r2 - ref_r2)) < 2e-4
    assert jnp.max(jnp.abs(out_i2 - ref_i2)) < 2e-4

    # Final complex output (reshaped back to (batch, seq, out_features)).
    out = (out_r + 1j * out_i).reshape(batch, seq, out_features)
    jax.block_until_ready(out)

    print("KERNEL_OK")
</pallas_src>

<mosaic_0001>
module attributes {stable_mosaic.version = 11 : i64} {
  func.func @wire_kernel_packed(%arg0: i32, %arg1: memref<8x32xf32, #tpu.memory_space<vmem>>, %arg2: memref<8x32xf32, #tpu.memory_space<vmem>>, %arg3: memref<32x128xf32, #tpu.memory_space<vmem>>, %arg4: memref<32x128xf32, #tpu.memory_space<vmem>>, %arg5: memref<1x128xf32, #tpu.memory_space<vmem>>, %arg6: memref<8x128xf32, #tpu.memory_space<vmem>>) attributes {dimension_semantics = [#tpu.dimension_semantics<parallel>], iteration_bounds = array<i64: 2>, scalar_prefetch = 0 : i64, scratch_operands = 0 : i64, tpu.core_type = #tpu.core_type<tc>, window_params = [{transform_indices = @transform_0, window_bounds = array<i64: 8, 32>}, {transform_indices = @transform_1, window_bounds = array<i64: 8, 32>}, {pipeline_mode = #tpu.pipeline_mode<synchronous>, transform_indices = @transform_2, window_bounds = array<i64: 32, 128>}, {pipeline_mode = #tpu.pipeline_mode<synchronous>, transform_indices = @transform_3, window_bounds = array<i64: 32, 128>}, {pipeline_mode = #tpu.pipeline_mode<synchronous>, transform_indices = @transform_4, window_bounds = array<i64: 1, 128>}, {transform_indices = @transform_5, window_bounds = array<i64: 8, 128>}]} {
    %c0 = arith.constant 0 : index
    %c0_0 = arith.constant 0 : index
    %0 = vector.load %arg1[%c0, %c0_0] : memref<8x32xf32, #tpu.memory_space<vmem>>, vector<8x32xf32>
    %c0_1 = arith.constant 0 : index
    %c0_2 = arith.constant 0 : index
    %1 = vector.load %arg3[%c0_1, %c0_2] : memref<32x128xf32, #tpu.memory_space<vmem>>, vector<32x128xf32>
    %cst = arith.constant dense<0.000000e+00> : vector<8x128xf32>
    %2 = tpu.matmul %0, %1, %cst {dimension_numbers = #tpu.dot_dimension_numbers<[1], [0], [0], [1], [0, 0, 1, 1], [], []>, precision = #tpu.contract_precision<fp32>} : vector<8x32xf32>, vector<32x128xf32>, vector<8x128xf32> -> vector<8x128xf32>
    %c0_3 = arith.constant 0 : index
    %c0_4 = arith.constant 0 : index
    %3 = vector.load %arg2[%c0_3, %c0_4] : memref<8x32xf32, #tpu.memory_space<vmem>>, vector<8x32xf32>
    %c0_5 = arith.constant 0 : index
    %c0_6 = arith.constant 0 : index
    %4 = vector.load %arg4[%c0_5, %c0_6] : memref<32x128xf32, #tpu.memory_space<vmem>>, vector<32x128xf32>
    %cst_7 = arith.constant dense<0.000000e+00> : vector<8x128xf32>
    %5 = tpu.matmul %3, %4, %cst_7 {dimension_numbers = #tpu.dot_dimension_numbers<[1], [0], [0], [1], [0, 0, 1, 1], [], []>, precision = #tpu.contract_precision<fp32>} : vector<8x32xf32>, vector<32x128xf32>, vector<8x128xf32> -> vector<8x128xf32>
    %6 = arith.addf %2, %5 : vector<8x128xf32>
    %c0_8 = arith.constant 0 : index
    %c0_9 = arith.constant 0 : index
    %7 = vector.load %arg5[%c0_8, %c0_9] : memref<1x128xf32, #tpu.memory_space<vmem>>, vector<1x128xf32>
    %8 = vector.broadcast %7 : vector<1x128xf32> to vector<8x128xf32>
    %9 = arith.addf %6, %8 : vector<8x128xf32>
    %c64_i32 = arith.constant 64 : i32
    %10 = tpu.dynamic_rotate %9 by %c64_i32 dim 1 : vector<8x128xf32>, i32 -> vector<8x128xf32>
    %11 = tpu.iota {dimensions = array<i32: 1>} : vector<8x128xi32>
    %c64_i32_10 = arith.constant 64 : i32
    %12 = vector.broadcast %c64_i32_10 : i32 to vector<8x128xi32>
    %13 = arith.cmpi slt, %11, %12 : vector<8x128xi32>
    %14 = arith.select %13, %9, %10 : vector<8x128xi1>, vector<8x128xf32>
    %15 = arith.select %13, %10, %9 : vector<8x128xi1>, vector<8x128xf32>
    %cst_11 = arith.constant -3.000000e+01 : f32
    %16 = vector.broadcast %cst_11 : f32 to vector<8x128xf32>
    %17 = arith.mulf %16, %15 : vector<8x128xf32>
    %18 = arith.mulf %14, %14 : vector<8x128xf32>
    %19 = arith.mulf %15, %15 : vector<8x128xf32>
    %20 = arith.addf %18, %19 : vector<8x128xf32>
    %cst_12 = arith.constant 1.000000e+02 : f32
    %21 = vector.broadcast %cst_12 : f32 to vector<8x128xf32>
    %22 = arith.mulf %21, %20 : vector<8x128xf32>
    %23 = arith.subf %17, %22 : vector<8x128xf32>
    %24 = math.exp %23 : vector<8x128xf32>
    %cst_13 = arith.constant 3.000000e+01 : f32
    %25 = vector.broadcast %cst_13 : f32 to vector<8x128xf32>
    %26 = arith.mulf %25, %14 : vector<8x128xf32>
    %cst_14 = arith.constant 1.57079637 : f32
    %cst_15 = arith.constant 0.000000e+00 : f32
    %27 = vector.broadcast %cst_14 : f32 to vector<8x128xf32>
    %28 = vector.broadcast %cst_15 : f32 to vector<8x128xf32>
    %29 = arith.select %13, %27, %28 : vector<8x128xi1>, vector<8x128xf32>
    %30 = arith.addf %26, %29 : vector<8x128xf32>
    %31 = math.sin %30 : vector<8x128xf32>
    %32 = arith.mulf %24, %31 : vector<8x128xf32>
    %c0_16 = arith.constant 0 : index
    %c0_17 = arith.constant 0 : index
    %33 = vector.load %arg6[%c0_16, %c0_17] : memref<8x128xf32, #tpu.memory_space<vmem>>, vector<8x128xf32>
    tpu.vector_store %arg6[%c0_16, %c0_17], %32 {strides = array<i32>} : memref<8x128xf32, #tpu.memory_space<vmem>>, vector<8x128xf32>,
    return
  }
  func.func @transform_0(%arg0: i32) -> (i32, i32) {
    %c0_i32 = arith.constant 0 : i32
    %c0_i32_0 = arith.constant 0 : i32
    return %arg0, %c0_i32 : i32, i32
  }
  func.func @transform_1(%arg0: i32) -> (i32, i32) {
    %c0_i32 = arith.constant 0 : i32
    %c0_i32_0 = arith.constant 0 : i32
    return %arg0, %c0_i32 : i32, i32
  }
  func.func @transform_2(%arg0: i32) -> (i32, i32) {
    %c0_i32 = arith.constant 0 : i32
    %c0_i32_0 = arith.constant 0 : i32
    %c0_i32_1 = arith.constant 0 : i32
    return %c0_i32, %c0_i32_0 : i32, i32
  }
  func.func @transform_3(%arg0: i32) -> (i32, i32) {
    %c0_i32 = arith.constant 0 : i32
    %c0_i32_0 = arith.constant 0 : i32
    %c0_i32_1 = arith.constant 0 : i32
    return %c0_i32, %c0_i32_0 : i32, i32
  }
  func.func @transform_4(%arg0: i32) -> (i32, i32) {
    %c0_i32 = arith.constant 0 : i32
    %c0_i32_0 = arith.constant 0 : i32
    %c0_i32_1 = arith.constant 0 : i32
    return %c0_i32, %c0_i32_0 : i32, i32
  }
  func.func @transform_5(%arg0: i32) -> (i32, i32) {
    %c0_i32 = arith.constant 0 : i32
    %c0_i32_0 = arith.constant 0 : i32
    return %arg0, %c0_i32 : i32, i32
  }
}

</mosaic_0001>

<llo_original>
// kernel: wire_layer.1
$region0: #{wire_layer.1}
  #allocation0 [shape = 'u32[]', space=smem, size = 0x4, offset = 0x4, fixed_abs, tag = 'smem constant byte address 0x4 - core index']
  #allocation1 [shape = 'u32[144,128]{1,0:T(1,128)}', space=vmem, size = 0x12000, scoped, tag = 'internal scratch']
  %s0 = inlined_call_operand.vmem [shape: f32[16,32], index: 0, kind: input, shape index: {}]
  %s1 = inlined_call_operand.vmem [shape: f32[16,32], index: 1, kind: input, shape index: {}]
  %s2 = inlined_call_operand.vmem [shape: f32[32,128], index: 2, kind: input, shape index: {}]
  %s3 = inlined_call_operand.vmem [shape: f32[32,128], index: 3, kind: input, shape index: {}]
  %s4 = inlined_call_operand.vmem [shape: f32[1,128], index: 4, kind: input, shape index: {}]
  %s5 = inlined_call_operand.vmem [shape: f32[16,128], index: 5, kind: output, shape index: {}]
  %s6 = sld [smem:[#allocation0]]
  $region53: #{wire_layer.1} parent=0
    _
  %s8 = ssub.s32 1, %s6
  %s9 = scalar_select 0, %s8, %s6
  loop: start=0, step=1, limit=4
  $region2: #{wire_layer.1} parent=0 // loop_pre_header
    _
  $region3: #{wire_layer.1} parent=0 // loop_header
    %s11 = sphi 0, %s15
    %p12 = scmp.ge.s32.totalorder %s11, 4
    %s21 = sphi 0, %s23
    %s24 = sphi 0, %s21
    %s25 = sphi 0, %s24
    %s41 = sphi 0, %s25
    %s47 = sphi 0, %s49
    %s50 = sphi 0, %s47
    %s51 = sphi 0, %s50
    %s67 = sphi 0, %s51
    %s71 = sphi 0, %s71
    %s73 = sphi 0, %s71
    %s74 = sphi 0, %s73
    %s88 = sphi 0, %s74
    %s92 = sphi 0, %s92
    %s94 = sphi 0, %s92
    %s95 = sphi 0, %s94
    %s109 = sphi 0, %s95
    %s113 = sphi 0, %s113
    %s115 = sphi 0, %s113
    %s116 = sphi 0, %s115
    %s130 = sphi 0, %s116
    %s136 = sphi 0, %s138
    %s139 = sphi 0, %s136
    %s140 = sphi 0, %s139
    %s156 = sphi 0, %s140
  $region4: #{wire_layer.1} parent=0 // loop_header_branch
    %14 = sbr.rel (%p12) target = $region8
  $region5: #{wire_layer.1} parent=0 // loop_body
    %s16 = ssub.s32 %s11, 1
    %s17 = ssub.s32 %s11, 2
    %s18 = sadd.s32 %s11, 1
    %s19 = ssub.s32 %s11, %s18
    %p20 = scmp.eq.s32.totalorder %s19, 0
    %s22 = sadd.s32 %s21, 1
    %s23 = scalar_select %p20, %s21, %s22
    %p26 = pneg %p20
    %p27 = scmp.eq.s32.totalorder %s11, 1
    %p28 = por %p26, %p27
    %p29 = scmp.ne.s32.totalorder %s21, %s24
    %p30 = scmp.eq.s32.totalorder %s11, 0
    %p31 = por %p29, %p30
    %p32 = scmp.ne.s32.totalorder %s21, %s24
    %p33 = scmp.eq.s32.totalorder %s16, 1
    %p34 = por %p32, %p33
    %p35 = scmp.ne.s32.totalorder %s24, %s25
    %p36 = scmp.eq.s32.totalorder %s16, 0
    %p37 = por %p35, %p36
    %p38 = scmp.ne.s32.totalorder %s24, %s25
    %p39 = scmp.eq.s32.totalorder %s17, 1
    %p40 = por %p38, %p39
    %p42 = scmp.ne.s32.totalorder %s25, %s41
    %p43 = scmp.eq.s32.totalorder %s17, 0
    %p44 = por %p42, %p43
    %s45 = ssub.s32 %s11, %s18
    %p46 = scmp.eq.s32.totalorder %s45, 0
    %s48 = sadd.s32 %s47, 1
    %s49 = scalar_select %p46, %s47, %s48
    %p52 = pneg %p46
    %p53 = scmp.eq.s32.totalorder %s11, 1
    %p54 = por %p52, %p53
    %p55 = scmp.ne.s32.totalorder %s47, %s50
    %p56 = scmp.eq.s32.totalorder %s11, 0
    %p57 = por %p55, %p56
    %p58 = scmp.ne.s32.totalorder %s47, %s50
    %p59 = scmp.eq.s32.totalorder %s16, 1
    %p60 = por %p58, %p59
    %p61 = scmp.ne.s32.totalorder %s50, %s51
    %p62 = scmp.eq.s32.totalorder %s16, 0
    %p63 = por %p61, %p62
    %p64 = scmp.ne.s32.totalorder %s50, %s51
    %p65 = scmp.eq.s32.totalorder %s17, 1
    %p66 = por %p64, %p65
    %p68 = scmp.ne.s32.totalorder %s51, %s67
    %p69 = scmp.eq.s32.totalorder %s17, 0
    %p70 = por %p68, %p69
    %s72 = sadd.s32 %s71, 1
    %p75 = scmp.eq.s32.totalorder %s11, 1
    %p76 = scmp.ne.s32.totalorder %s71, %s73
    %p77 = scmp.eq.s32.totalorder %s11, 0
    %p78 = por %p76, %p77
    %p79 = scmp.ne.s32.totalorder %s71, %s73
    %p80 = scmp.eq.s32.totalorder %s16, 1
    %p81 = por %p79, %p80
    %p82 = scmp.ne.s32.totalorder %s73, %s74
    %p83 = scmp.eq.s32.totalorder %s16, 0
    %p84 = por %p82, %p83
    %p85 = scmp.ne.s32.totalorder %s73, %s74
    %p86 = scmp.eq.s32.totalorder %s17, 1
    %p87 = por %p85, %p86
    %p89 = scmp.ne.s32.totalorder %s74, %s88
    %p90 = scmp.eq.s32.totalorder %s17, 0
    %p91 = por %p89, %p90
    %s93 = sadd.s32 %s92, 1
    %p96 = scmp.eq.s32.totalorder %s11, 1
    %p97 = scmp.ne.s32.totalorder %s92, %s94
    %p98 = scmp.eq.s32.totalorder %s11, 0
    %p99 = por %p97, %p98
    %p100 = scmp.ne.s32.totalorder %s92, %s94
    %p101 = scmp.eq.s32.totalorder %s16, 1
    %p102 = por %p100, %p101
    %p103 = scmp.ne.s32.totalorder %s94, %s95
    %p104 = scmp.eq.s32.totalorder %s16, 0
    %p105 = por %p103, %p104
    %p106 = scmp.ne.s32.totalorder %s94, %s95
    %p107 = scmp.eq.s32.totalorder %s17, 1
    %p108 = por %p106, %p107
    %p110 = scmp.ne.s32.totalorder %s95, %s109
    %p111 = scmp.eq.s32.totalorder %s17, 0
    %p112 = por %p110, %p111
    %s114 = sadd.s32 %s113, 1
    %p117 = scmp.eq.s32.totalorder %s11, 1
    %p118 = scmp.ne.s32.totalorder %s113, %s115
    %p119 = scmp.eq.s32.totalorder %s11, 0
    %p120 = por %p118, %p119
    %p121 = scmp.ne.s32.totalorder %s113, %s115
    %p122 = scmp.eq.s32.totalorder %s16, 1
    %p123 = por %p121, %p122
    %p124 = scmp.ne.s32.totalorder %s115, %s116
    %p125 = scmp.eq.s32.totalorder %s16, 0
    %p126 = por %p124, %p125
    %p127 = scmp.ne.s32.totalorder %s115, %s116
    %p128 = scmp.eq.s32.totalorder %s17, 1
    %p129 = por %p127, %p128
    %p131 = scmp.ne.s32.totalorder %s116, %s130
    %p132 = scmp.eq.s32.totalorder %s17, 0
    %p133 = por %p131, %p132
    %s134 = ssub.s32 %s11, %s18
    %p135 = scmp.eq.s32.totalorder %s134, 0
    %s137 = sadd.s32 %s136, 1
    %s138 = scalar_select %p135, %s136, %s137
    %p141 = pneg %p135
    %p142 = scmp.eq.s32.totalorder %s11, 1
    %p143 = por %p141, %p142
    %p144 = scmp.ne.s32.totalorder %s136, %s139
    %p145 = scmp.eq.s32.totalorder %s11, 0
    %p146 = por %p144, %p145
    %p147 = scmp.ne.s32.totalorder %s136, %s139
    %p148 = scmp.eq.s32.totalorder %s16, 1
    %p149 = por %p147, %p148
    %p150 = scmp.ne.s32.totalorder %s139, %s140
    %p151 = scmp.eq.s32.totalorder %s16, 0
    %p152 = por %p150, %p151
    %p153 = scmp.ne.s32.totalorder %s139, %s140
    %p154 = scmp.eq.s32.totalorder %s17, 1
    %p155 = por %p153, %p154
    %p157 = scmp.ne.s32.totalorder %s140, %s156
    %p158 = scmp.eq.s32.totalorder %s17, 0
    %p159 = por %p157, %p158
    %p160 = scmp.le.s32.totalorder 1, %s11
    %p161 = scmp.lt.s32.totalorder %s11, 3
    %p162 = pnand %p160, %p161
    %p163 = pneg %p162
    // Predicated region
    $region9: #{wire_layer.1} parent=5 // pred_check
      _
    $region10: #{wire_layer.1} parent=5 // pred_check_branch
      %165 = sbr.rel (%p162) target = $region12
    $region11: #{wire_layer.1} parent=5 // pred_region
      %s166 = ssub.s32 %s11, 1
      // Predicated region
      $region13: #{wire_layer.1} parent=11 // pred_check
        %p167 = pneg %p84
      $region14: #{wire_layer.1} parent=11 // pred_check_branch
        %169 = sbr.rel (%p167) target = $region16
      $region15: #{wire_layer.1} parent=11 // pred_region
        _
      $region16: #{wire_layer.1} parent=11 // pred_fallthru
        _
      // Predicated region
      $region17: #{wire_layer.1} parent=11 // pred_check
        %p170 = pneg %p105
      $region18: #{wire_layer.1} parent=11 // pred_check_branch
        %172 = sbr.rel (%p170) target = $region20
      $region19: #{wire_layer.1} parent=11 // pred_region
        _
      $region20: #{wire_layer.1} parent=11 // pred_fallthru
        _
      // Predicated region
      $region21: #{wire_layer.1} parent=11 // pred_check
        %p173 = pneg %p126
      $region22: #{wire_layer.1} parent=11 // pred_check_branch
        %175 = sbr.rel (%p173) target = $region24
      $region23: #{wire_layer.1} parent=11 // pred_region
        _
      $region24: #{wire_layer.1} parent=11 // pred_fallthru
        _
    $region12: #{wire_layer.1} parent=5 // pred_fallthru
      _
    %p176 = scmp.lt.s32.totalorder %s11, 2
    // Predicated region
    $region25: #{wire_layer.1} parent=5 // pred_check
      %p177 = pneg %p176
    $region26: #{wire_layer.1} parent=5 // pred_check_branch
      %179 = sbr.rel (%p177) target = $region28
    $region27: #{wire_layer.1} parent=5 // pred_region
      // Predicated region
      $region29: #{wire_layer.1} parent=27 // pred_check
        %p180 = pneg %p31
      $region30: #{wire_layer.1} parent=27 // pred_check_branch
        %182 = sbr.rel (%p180) target = $region32
      $region31: #{wire_layer.1} parent=27 // pred_region
        %p183 = scmp.lt.s32.totalorder %s11, 1
        %s184 = scalar_select %p183, %s11, 1
        %s185 = smul.addr %s184, 8
        %s186 = scalar_lea.vmem %s0, %s185
      $region32: #{wire_layer.1} parent=27 // pred_fallthru
        _
      // Predicated region
      $region33: #{wire_layer.1} parent=27 // pred_check
        %p187 = pneg %p57
      $region34: #{wire_layer.1} parent=27 // pred_check_branch
        %189 = sbr.rel (%p187) target = $region36
      $region35: #{wire_layer.1} parent=27 // pred_region
        %p190 = scmp.lt.s32.totalorder %s11, 1
        %s191 = scalar_select %p190, %s11, 1
        %s192 = smul.addr %s191, 8
        %s193 = scalar_lea.vmem %s1, %s192
      $region36: #{wire_layer.1} parent=27 // pred_fallthru
        _
    $region28: #{wire_layer.1} parent=5 // pred_fallthru
      _
    %p194 = scmp.le.s32.totalorder 1, %s11
    %p195 = scmp.lt.s32.totalorder %s11, 3
    %p196 = pnand %p194, %p195
    %p197 = pneg %p196
    // Predicated region
    $region37: #{wire_layer.1} parent=5 // pred_check
      _
    $region38: #{wire_layer.1} parent=5 // pred_check_branch
      %199 = sbr.rel (%p196) target = $region40
    $region39: #{wire_layer.1} parent=5 // pred_region
      %s200 = ssub.s32 %s11, 1
      %p201 = scmp.lt.s32.totalorder %s16, 1
      %s202 = scalar_select %p201, %s16, 1
      %s203 = smul.addr %s202, 8
      %s204 = scalar_lea.vmem %s0, %s203
      %p205 = pneg %p37
      %p206 = pneg %p34
      %p207 = scmp.lt.s32.totalorder %s16, 1
      %s208 = scalar_select %p207, %s16, 1
      %s209 = smul.addr %s208, 8
      %s210 = scalar_lea.vmem %s1, %s209
      %p211 = pneg %p63
      %p212 = pneg %p60
      %p213 = pneg %p84
      %p214 = pneg %p81
      %p215 = pneg %p105
      %p216 = pneg %p102
      %p217 = pneg %p126
      %p218 = pneg %p123
      %p219 = pneg %p152
      %p220 = pneg %p149
      %p221 = scmp.lt.s32.totalorder %s16, 1
      %s222 = scalar_select %p221, %s16, 1
      %s223 = smul.addr %s222, 8
      %s224 = scalar_lea.vmem %s5, %s223
      %p225 = scmp.lt.s32.totalorder %s16, 1
      %s226 = scalar_select %p225, %s16, 1
      %s227 = smul.addr %s226, 8
      %s228 = scalar_lea.vmem %s0, %s227
      %p229 = scmp.lt.s32.totalorder %s16, 1
      %s230 = scalar_select %p229, %s16, 1
      %s231 = smul.addr %s230, 8
      %s232 = scalar_lea.vmem %s1, %s231
      %p233 = scmp.lt.s32.totalorder %s16, 1
      %s234 = scalar_select %p233, %s16, 1
      %s235 = smul.addr %s234, 8
      %s236 = scalar_lea.vmem %s5, %s235
      %v237 = vld [vmem:[%s228] sm:$0xff]
      %v238 = vld [vmem:[%s2] sm:$0xff]
      %v239 = vld [vmem:[%s2 + $0x8] sm:$0xff]
      %v240 = vld [vmem:[%s2 + $0x10] sm:$0xff]
      %v241 = vld [vmem:[%s2 + $0x18] sm:$0xff]
      %v242 = vld [vmem:[%s232] sm:$0xff]
      %v243 = vld [vmem:[%s3] sm:$0xff]
      %v244 = vld [vmem:[%s3 + $0x8] sm:$0xff]
      %v245 = vld [vmem:[%s3 + $0x10] sm:$0xff]
      %v246 = vld [vmem:[%s3 + $0x18] sm:$0xff]
      %vm247 = vcmask 261120
      %v249 = vsel %vm247, %v242, 0
      %251 = vmatprep.subr.mxu0 0.0
      %v252 = vand.u32 %v243, 4294901760
      %253 = vmatpush1.msra.mxu0 %v252
      %254 = vmatprep.subr.mxu0 0.0
      %v255 = vand.u32 %v244, 4294901760
      %256 = vmatpush1.msra.mxu0 %v255
      %257 = vmatprep.subr.mxu0 0.0
      %v258 = vand.u32 %v245, 4294901760
      %259 = vmatpush1.msra.mxu0 %v258
      %260 = vmatprep.subr.mxu0 0.0
      %v261 = vand.u32 %v246, 4294901760
      %262 = vmatpush1.msra.mxu0 %v261
      %263 = vmatprep.subr.mxu0 0.0
      %264 = vmatpush1.msra.mxu0 0.0
      %265 = vmatprep.subr.mxu0 0.0
      %266 = vmatpush1.msra.mxu0 0.0
      %267 = vmatprep.subr.mxu0 0.0
      %268 = vmatpush1.msra.mxu0 0.0
      %269 = vmatprep.subr.mxu0 0.0
      %270 = vmatpush1.msra.mxu0 0.0
      %271 = vmatprep.subr.mxu0 0.0
      %272 = vmatpush1.msra.mxu0 0.0
      %273 = vmatprep.subr.mxu0 0.0
      %274 = vmatpush1.msra.mxu0 0.0
      %275 = vmatprep.subr.mxu0 0.0
      %276 = vmatpush1.msra.mxu0 0.0
      %277 = vmatprep.subr.mxu0 0.0
      %278 = vmatpush1.msra.mxu0 0.0
      %279 = vmatprep.subr.mxu0 0.0
      %280 = vmatpush1.msra.mxu0 0.0
      %281 = vmatprep.subr.mxu0 0.0
      %282 = vmatpush1.msra.mxu0 0.0
      %283 = vmatprep.subr.mxu0 0.0
      %284 = vmatpush1.msra.mxu0 0.0
      %285 = vmatprep.subr.mxu0 0.0
      %286 = vmatpush1.msra.mxu0 0.0
      %287 = vmatprep.subr.mxu0 0.0
      %288 = vmatpush1.msra.mxu0 0.0
      %289 = vmatprep.subr.mxu0 0.0
      %290 = vmatpush1.msra.mxu0 0.0
      %291 = vmatprep.subr.mxu0 0.0
      %292 = vmatpush1.msra.mxu0 0.0
      %293 = vmatprep.subr.mxu0 0.0
      %294 = vmatpush1.msra.mxu0 0.0
      %295 = vmatprep.subr.mxu0 0.0
      %296 = vmatpush1.msra.mxu0 0.0
      %297 = vmatprep.subr.mxu0 0.0
      %298 = vmatpush1.msra.mxu0 0.0
      %299 = vmatprep.subr.mxu0 0.0
      %300 = vmatpush1.msra.mxu0 0.0
      %301 = vmatprep.subr.mxu0 0.0
      %302 = vmatpush1.msra.mxu0 0.0
      %303 = vmatprep.subr.mxu0 0.0
      %304 = vmatpush1.msra.mxu0 0.0
      %305 = vmatprep.subr.mxu0 0.0
      %306 = vmatpush1.msra.mxu0 0.0
      %307 = vmatprep.subr.mxu0 0.0
      %308 = vmatpush1.msra.mxu0 0.0
      %309 = vmatprep.subr.mxu0 0.0
      %310 = vmatpush1.msra.mxu0 0.0
      %311 = vmatprep.subr.mxu0 0.0
      %312 = vmatpush1.msra.mxu0 0.0
      %313 = vmatprep.subr.mxu0 0.0
      %314 = vmatpush1.msra.mxu0 0.0
      %315 = vmatprep.subr.mxu0 0.0
      %316 = vmatpush1.msra.mxu0 0.0
      %317 = vmatprep.subr.mxu0 0.0
      %318 = vmatpush1.msra.mxu0 0.0
      %319 = vmatprep.mubr.f32.mxu0 0.0
      %v320 = vand.u32 %v249, 4294901760
      %v321 = vsub.f32 %v249, %v320
      %v322 = vand.u32 %v321, 4294901760
      %v323 = vsub.f32 %v321, %v322
      %v324 = vand.u32 %v323, 4294901760
      %325 = vmatmul.mubr.f32.gmra.mrb[0].mxu0 %v324
      %v326 = vpop.f32.mrb[0].mxu0
      %v327 = vadd.f32 0.0, %v326
      %v328 = vpop.f32.mrb[0].mxu0
      %329 = vdwg.mxu0
      %330 = vmatprep.subr.mxu0 0.0
      %v331 = vand.u32 %v243, 4294901760
      %v332 = vsub.f32 %v243, %v331
      %v333 = vand.u32 %v332, 4294901760
      %v334 = vsub.f32 %v332, %v333
      %v335 = vand.u32 %v334, 4294901760
      %336 = vmatpush1.msra.mxu0 %v335
      %337 = vmatprep.subr.mxu0 0.0
      %v338 = vand.u32 %v244, 4294901760
      %v339 = vsub.f32 %v244, %v338
      %v340 = vand.u32 %v339, 4294901760
      %v341 = vsub.f32 %v339, %v340
      %v342 = vand.u32 %v341, 4294901760
      %343 = vmatpush1.msra.mxu0 %v342
      %344 = vmatprep.subr.mxu0 0.0
      %v345 = vand.u32 %v245, 4294901760
      %v346 = vsub.f32 %v245, %v345
      %v347 = vand.u32 %v346, 4294901760
      %v348 = vsub.f32 %v346, %v347
      %v349 = vand.u32 %v348, 4294901760
      %350 = vmatpush1.msra.mxu0 %v349
      %351 = vmatprep.subr.mxu0 0.0
      %v352 = vand.u32 %v246, 4294901760
      %v353 = vsub.f32 %v246, %v352
      %v354 = vand.u32 %v353, 4294901760
      %v355 = vsub.f32 %v353, %v354
      %v356 = vand.u32 %v355, 4294901760
      %357 = vmatpush1.msra.mxu0 %v356
      %358 = vmatprep.subr.mxu0 0.0
      %359 = vmatpush1.msra.mxu0 0.0
      %360 = vmatprep.subr.mxu0 0.0
      %361 = vmatpush1.msra.mxu0 0.0
      %362 = vmatprep.subr.mxu0 0.0
      %363 = vmatpush1.msra.mxu0 0.0
      %364 = vmatprep.subr.mxu0 0.0
      %365 = vmatpush1.msra.mxu0 0.0
      %366 = vmatprep.subr.mxu0 0.0
      %367 = vmatpush1.msra.mxu0 0.0
      %368 = vmatprep.subr.mxu0 0.0
      %369 = vmatpush1.msra.mxu0 0.0
      %370 = vmatprep.subr.mxu0 0.0
      %371 = vmatpush1.msra.mxu0 0.0
      %372 = vmatprep.subr.mxu0 0.0
      %373 = vmatpush1.msra.mxu0 0.0
      %374 = vmatprep.subr.mxu0 0.0
      %375 = vmatpush1.msra.mxu0 0.0
      %376 = vmatprep.subr.mxu0 0.0
      %377 = vmatpush1.msra.mxu0 0.0
      %378 = vmatprep.subr.mxu0 0.0
      %379 = vmatpush1.msra.mxu0 0.0
      %380 = vmatprep.subr.mxu0 0.0
      %381 = vmatpush1.msra.mxu0 0.0
      %382 = vmatprep.subr.mxu0 0.0
      %383 = vmatpush1.msra.mxu0 0.0
      %384 = vmatprep.subr.mxu0 0.0
      %385 = vmatpush1.msra.mxu0 0.0
      %386 = vmatprep.subr.mxu0 0.0
      %387 = vmatpush1.msra.mxu0 0.0
      %388 = vmatprep.subr.mxu0 0.0
      %389 = vmatpush1.msra.mxu0 0.0
      %390 = vmatprep.subr.mxu0 0.0
      %391 = vmatpush1.msra.mxu0 0.0
      %392 = vmatprep.subr.mxu0 0.0
      %393 = vmatpush1.msra.mxu0 0.0
      %394 = vmatprep.subr.mxu0 0.0
      %395 = vmatpush1.msra.mxu0 0.0
      %396 = vmatprep.subr.mxu0 0.0
      %397 = vmatpush1.msra.mxu0 0.0
      %398 = vmatprep.subr.mxu0 0.0
      %399 = vmatpush1.msra.mxu0 0.0
      %400 = vmatprep.subr.mxu0 0.0
      %401 = vmatpush1.msra.mxu0 0.0
      %402 = vmatprep.subr.mxu0 0.0
      %403 = vmatpush1.msra.mxu0 0.0
      %404 = vmatprep.subr.mxu0 0.0
      %405 = vmatpush1.msra.mxu0 0.0
      %406 = vmatprep.subr.mxu0 0.0
      %407 = vmatpush1.msra.mxu0 0.0
      %408 = vmatprep.subr.mxu0 0.0
      %409 = vmatpush1.msra.mxu0 0.0
      %410 = vmatprep.subr.mxu0 0.0
      %411 = vmatpush1.msra.mxu0 0.0
      %412 = vmatprep.subr.mxu0 0.0
      %413 = vmatpush1.msra.mxu0 0.0
      %414 = vmatprep.mubr.f32.mxu0 0.0
      %v415 = vand.u32 %v249, 4294901760
      %416 = vmatmul.mubr.f32.gmra.mrb[0].mxu0 %v415
      %v417 = vpop.f32.mrb[0].mxu0
      %v418 = vadd.f32 %v327, %v417
      %v419 = vpop.f32.mrb[0].mxu0
      %420 = vdwg.mxu0
      %421 = vmatprep.subr.mxu0 0.0
      %v422 = vand.u32 %v243, 4294901760
      %v423 = vsub.f32 %v243, %v422
      %424 = vmatpush1.msra.mxu0 %v423
      %425 = vmatprep.subr.mxu0 0.0
      %v426 = vand.u32 %v244, 4294901760
      %v427 = vsub.f32 %v244, %v426
      %428 = vmatpush1.msra.mxu0 %v427
      %429 = vmatprep.subr.mxu0 0.0
      %v430 = vand.u32 %v245, 4294901760
      %v431 = vsub.f32 %v245, %v430
      %432 = vmatpush1.msra.mxu0 %v431
      %433 = vmatprep.subr.mxu0 0.0
      %v434 = vand.u32 %v246, 4294901760
      %v435 = vsub.f32 %v246, %v434
      %436 = vmatpush1.msra.mxu0 %v435
      %437 = vmatprep.subr.mxu0 0.0
      %438 = vmatpush1.msra.mxu0 0.0
      %439 = vmatprep.subr.mxu0 0.0
      %440 = vmatpush1.msra.mxu0 0.0
      %441 = vmatprep.subr.mxu0 0.0
      %442 = vmatpush1.msra.mxu0 0.0
      %443 = vmatprep.subr.mxu0 0.0
      %444 = vmatpush1.msra.mxu0 0.0
      %445 = vmatprep.subr.mxu0 0.0
      %446 = vmatpush1.msra.mxu0 0.0
      %447 = vmatprep.subr.mxu0 0.0
      %448 = vmatpush1.msra.mxu0 0.0
      %449 = vmatprep.subr.mxu0 0.0
      %450 = vmatpush1.msra.mxu0 0.0
      %451 = vmatprep.subr.mxu0 0.0
      %452 = vmatpush1.msra.mxu0 0.0
      %453 = vmatprep.subr.mxu0 0.0
      %454 = vmatpush1.msra.mxu0 0.0
      %455 = vmatprep.subr.mxu0 0.0
      %456 = vmatpush1.msra.mxu0 0.0
      %457 = vmatprep.subr.mxu0 0.0
      %458 = vmatpush1.msra.mxu0 0.0
      %459 = vmatprep.subr.mxu0 0.0
      %460 = vmatpush1.msra.mxu0 0.0
      %461 = vmatprep.subr.mxu0 0.0
      %462 = vmatpush1.msra.mxu0 0.0
      %463 = vmatprep.subr.mxu0 0.0
      %464 = vmatpush1.msra.mxu0 0.0
      %465 = vmatprep.subr.mxu0 0.0
      %466 = vmatpush1.msra.mxu0 0.0
      %467 = vmatprep.subr.mxu0 0.0
      %468 = vmatpush1.msra.mxu0 0.0
      %469 = vmatprep.subr.mxu0 0.0
      %470 = vmatpush1.msra.mxu0 0.0
      %471 = vmatprep.subr.mxu0 0.0
      %472 = vmatpush1.msra.mxu0 0.0
      %473 = vmatprep.subr.mxu0 0.0
      %474 = vmatpush1.msra.mxu0 0.0
      %475 = vmatprep.subr.mxu0 0.0
      %476 = vmatpush1.msra.mxu0 0.0
      %477 = vmatprep.subr.mxu0 0.0
      %478 = vmatpush1.msra.mxu0 0.0
      %479 = vmatprep.subr.mxu0 0.0
      %480 = vmatpush1.msra.mxu0 0.0
      %481 = vmatprep.subr.mxu0 0.0
      %482 = vmatpush1.msra.mxu0 0.0
      %483 = vmatprep.subr.mxu0 0.0
      %484 = vmatpush1.msra.mxu0 0.0
      %485 = vmatprep.subr.mxu0 0.0
      %486 = vmatpush1.msra.mxu0 0.0
      %487 = vmatprep.subr.mxu0 0.0
      %488 = vmatpush1.msra.mxu0 0.0
      %489 = vmatprep.subr.mxu0 0.0
      %490 = vmatpush1.msra.mxu0 0.0
      %491 = vmatprep.subr.mxu0 0.0
      %492 = vmatpush1.msra.mxu0 0.0
      %493 = vmatprep.mubr.f32.mxu0 0.0
      %v494 = vand.u32 %v249, 4294901760
      %v495 = vsub.f32 %v249, %v494
      %496 = vmatmul.mubr.f32.gmra.mrb[0].mxu0 %v495
      %v497 = vpop.f32.mrb[0].mxu0
      %v498 = vadd.f32 %v418, %v497
      %v499 = vpop.f32.mrb[0].mxu0
      %500 = vdwg.mxu0
      %501 = vmatprep.subr.mxu0 0.0
      %v502 = vand.u32 %v243, 4294901760
      %503 = vmatpush1.msra.mxu0 %v502
      %504 = vmatprep.subr.mxu0 0.0
      %v505 = vand.u32 %v244, 4294901760
      %506 = vmatpush1.msra.mxu0 %v505
      %507 = vmatprep.subr.mxu0 0.0
      %v508 = vand.u32 %v245, 4294901760
      %509 = vmatpush1.msra.mxu0 %v508
      %510 = vmatprep.subr.mxu0 0.0
      %v511 = vand.u32 %v246, 4294901760
      %512 = vmatpush1.msra.mxu0 %v511
      %513 = vmatprep.subr.mxu0 0.0
      %514 = vmatpush1.msra.mxu0 0.0
      %515 = vmatprep.subr.mxu0 0.0
      %516 = vmatpush1.msra.mxu0 0.0
      %517 = vmatprep.subr.mxu0 0.0
      %518 = vmatpush1.msra.mxu0 0.0
      %519 = vmatprep.subr.mxu0 0.0
      %520 = vmatpush1.msra.mxu0 0.0
      %521 = vmatprep.subr.mxu0 0.0
      %522 = vmatpush1.msra.mxu0 0.0
      %523 = vmatprep.subr.mxu0 0.0
      %524 = vmatpush1.msra.mxu0 0.0
      %525 = vmatprep.subr.mxu0 0.0
      %526 = vmatpush1.msra.mxu0 0.0
      %527 = vmatprep.subr.mxu0 0.0
      %528 = vmatpush1.msra.mxu0 0.0
      %529 = vmatprep.subr.mxu0 0.0
      %530 = vmatpush1.msra.mxu0 0.0
      %531 = vmatprep.subr.mxu0 0.0
      %532 = vmatpush1.msra.mxu0 0.0
      %533 = vmatprep.subr.mxu0 0.0
      %534 = vmatpush1.msra.mxu0 0.0
      %535 = vmatprep.subr.mxu0 0.0
      %536 = vmatpush1.msra.mxu0 0.0
      %537 = vmatprep.subr.mxu0 0.0
      %538 = vmatpush1.msra.mxu0 0.0
      %539 = vmatprep.subr.mxu0 0.0
      %540 = vmatpush1.msra.mxu0 0.0
      %541 = vmatprep.subr.mxu0 0.0
      %542 = vmatpush1.msra.mxu0 0.0
      %543 = vmatprep.subr.mxu0 0.0
      %544 = vmatpush1.msra.mxu0 0.0
      %545 = vmatprep.subr.mxu0 0.0
      %546 = vmatpush1.msra.mxu0 0.0
      %547 = vmatprep.subr.mxu0 0.0
      %548 = vmatpush1.msra.mxu0 0.0
      %549 = vmatprep.subr.mxu0 0.0
      %550 = vmatpush1.msra.mxu0 0.0
      %551 = vmatprep.subr.mxu0 0.0
      %552 = vmatpush1.msra.mxu0 0.0
      %553 = vmatprep.subr.mxu0 0.0
      %554 = vmatpush1.msra.mxu0 0.0
      %555 = vmatprep.subr.mxu0 0.0
      %556 = vmatpush1.msra.mxu0 0.0
      %557 = vmatprep.subr.mxu0 0.0
      %558 = vmatpush1.msra.mxu0 0.0
      %559 = vmatprep.subr.mxu0 0.0
      %560 = vmatpush1.msra.mxu0 0.0
      %561 = vmatprep.subr.mxu0 0.0
      %562 = vmatpush1.msra.mxu0 0.0
      %563 = vmatprep.subr.mxu0 0.0
      %564 = vmatpush1.msra.mxu0 0.0
      %565 = vmatprep.subr.mxu0 0.0
      %566 = vmatpush1.msra.mxu0 0.0
      %567 = vmatprep.subr.mxu0 0.0
      %568 = vmatpush1.msra.mxu0 0.0
      %569 = vmatprep.mubr.f32.mxu0 0.0
      %v570 = vand.u32 %v249, 4294901760
      %v571 = vsub.f32 %v249, %v570
      %v572 = vand.u32 %v571, 4294901760
      %573 = vmatmul.mubr.f32.gmra.mrb[0].mxu0 %v572
      %v574 = vpop.f32.mrb[0].mxu0
      %v575 = vadd.f32 %v498, %v574
      %v576 = vpop.f32.mrb[0].mxu0
      %577 = vdwg.mxu0
      %578 = vmatprep.subr.mxu0 0.0
      %v579 = vand.u32 %v243, 4294901760
      %v580 = vsub.f32 %v243, %v579
      %v581 = vand.u32 %v580, 4294901760
      %582 = vmatpush1.msra.mxu0 %v581
      %583 = vmatprep.subr.mxu0 0.0
      %v584 = vand.u32 %v244, 4294901760
      %v585 = vsub.f32 %v244, %v584
      %v586 = vand.u32 %v585, 4294901760
      %587 = vmatpush1.msra.mxu0 %v586
      %588 = vmatprep.subr.mxu0 0.0
      %v589 = vand.u32 %v245, 4294901760
      %v590 = vsub.f32 %v245, %v589
      %v591 = vand.u32 %v590, 4294901760
      %592 = vmatpush1.msra.mxu0 %v591
      %593 = vmatprep.subr.mxu0 0.0
      %v594 = vand.u32 %v246, 4294901760
      %v595 = vsub.f32 %v246, %v594
      %v596 = vand.u32 %v595, 4294901760
      %597 = vmatpush1.msra.mxu0 %v596
      %598 = vmatprep.subr.mxu0 0.0
      %599 = vmatpush1.msra.mxu0 0.0
      %600 = vmatprep.subr.mxu0 0.0
      %601 = vmatpush1.msra.mxu0 0.0
      %602 = vmatprep.subr.mxu0 0.0
      %603 = vmatpush1.msra.mxu0 0.0
      %604 = vmatprep.subr.mxu0 0.0
      %605 = vmatpush1.msra.mxu0 0.0
      %606 = vmatprep.subr.mxu0 0.0
      %607 = vmatpush1.msra.mxu0 0.0
      %608 = vmatprep.subr.mxu0 0.0
      %609 = vmatpush1.msra.mxu0 0.0
      %610 = vmatprep.subr.mxu0 0.0
      %611 = vmatpush1.msra.mxu0 0.0
      %612 = vmatprep.subr.mxu0 0.0
      %613 = vmatpush1.msra.mxu0 0.0
      %614 = vmatprep.subr.mxu0 0.0
      %615 = vmatpush1.msra.mxu0 0.0
      %616 = vmatprep.subr.mxu0 0.0
      %617 = vmatpush1.msra.mxu0 0.0
      %618 = vmatprep.subr.mxu0 0.0
      %619 = vmatpush1.msra.mxu0 0.0
      %620 = vmatprep.subr.mxu0 0.0
      %621 = vmatpush1.msra.mxu0 0.0
      %622 = vmatprep.subr.mxu0 0.0
      %623 = vmatpush1.msra.mxu0 0.0
      %624 = vmatprep.subr.mxu0 0.0
      %625 = vmatpush1.msra.mxu0 0.0
      %626 = vmatprep.subr.mxu0 0.0
      %627 = vmatpush1.msra.mxu0 0.0
      %628 = vmatprep.subr.mxu0 0.0
      %629 = vmatpush1.msra.mxu0 0.0
      %630 = vmatprep.subr.mxu0 0.0
      %631 = vmatpush1.msra.mxu0 0.0
      %632 = vmatprep.subr.mxu0 0.0
      %633 = vmatpush1.msra.mxu0 0.0
      %634 = vmatprep.subr.mxu0 0.0
      %635 = vmatpush1.msra.mxu0 0.0
      %636 = vmatprep.subr.mxu0 0.0
      %637 = vmatpush1.msra.mxu0 0.0
      %638 = vmatprep.subr.mxu0 0.0
      %639 = vmatpush1.msra.mxu0 0.0
      %640 = vmatprep.subr.mxu0 0.0
      %641 = vmatpush1.msra.mxu0 0.0
      %642 = vmatprep.subr.mxu0 0.0
      %643 = vmatpush1.msra.mxu0 0.0
      %644 = vmatprep.subr.mxu0 0.0
      %645 = vmatpush1.msra.mxu0 0.0
      %646 = vmatprep.subr.mxu0 0.0
      %647 = vmatpush1.msra.mxu0 0.0
      %648 = vmatprep.subr.mxu0 0.0
      %649 = vmatpush1.msra.mxu0 0.0
      %650 = vmatprep.subr.mxu0 0.0
      %651 = vmatpush1.msra.mxu0 0.0
      %652 = vmatprep.subr.mxu0 0.0
      %653 = vmatpush1.msra.mxu0 0.0
      %654 = vmatprep.mubr.f32.mxu0 0.0
      %v655 = vand.u32 %v249, 4294901760
      %656 = vmatmul.mubr.f32.gmra.mrb[0].mxu0 %v655
      %v657 = vpop.f32.mrb[0].mxu0
      %v658 = vadd.f32 %v575, %v657
      %v659 = vpop.f32.mrb[0].mxu0
      %660 = vdwg.mxu0
      %661 = vmatprep.subr.mxu0 0.0
      %v662 = vand.u32 %v243, 4294901760
      %663 = vmatpush1.msra.mxu0 %v662
      %664 = vmatprep.subr.mxu0 0.0
      %v665 = vand.u32 %v244, 4294901760
      %666 = vmatpush1.msra.mxu0 %v665
      %667 = vmatprep.subr.mxu0 0.0
      %v668 = vand.u32 %v245, 4294901760
      %669 = vmatpush1.msra.mxu0 %v668
      %670 = vmatprep.subr.mxu0 0.0
      %v671 = vand.u32 %v246, 4294901760
      %672 = vmatpush1.msra.mxu0 %v671
      %673 = vmatprep.subr.mxu0 0.0
      %674 = vmatpush1.msra.mxu0 0.0
      %675 = vmatprep.subr.mxu0 0.0
      %676 = vmatpush1.msra.mxu0 0.0
      %677 = vmatprep.subr.mxu0 0.0
      %678 = vmatpush1.msra.mxu0 0.0
      %679 = vmatprep.subr.mxu0 0.0
      %680 = vmatpush1.msra.mxu0 0.0
      %681 = vmatprep.subr.mxu0 0.0
      %682 = vmatpush1.msra.mxu0 0.0
      %683 = vmatprep.subr.mxu0 0.0
      %684 = vmatpush1.msra.mxu0 0.0
      %685 = vmatprep.subr.mxu0 0.0
      %686 = vmatpush1.msra.mxu0 0.0
      %687 = vmatprep.subr.mxu0 0.0
      %688 = vmatpush1.msra.mxu0 0.0
      %689 = vmatprep.subr.mxu0 0.0
      %690 = vmatpush1.msra.mxu0 0.0
      %691 = vmatprep.subr.mxu0 0.0
      %692 = vmatpush1.msra.mxu0 0.0
      %693 = vmatprep.subr.mxu0 0.0
      %694 = vmatpush1.msra.mxu0 0.0
      %695 = vmatprep.subr.mxu0 0.0
      %696 = vmatpush1.msra.mxu0 0.0
      %697 = vmatprep.subr.mxu0 0.0
      %698 = vmatpush1.msra.mxu0 0.0
      %699 = vmatprep.subr.mxu0 0.0
      %700 = vmatpush1.msra.mxu0 0.0
      %701 = vmatprep.subr.mxu0 0.0
      %702 = vmatpush1.msra.mxu0 0.0
      %703 = vmatprep.subr.mxu0 0.0
      %704 = vmatpush1.msra.mxu0 0.0
      %705 = vmatprep.subr.mxu0 0.0
      %706 = vmatpush1.msra.mxu0 0.0
      %707 = vmatprep.subr.mxu0 0.0
      %708 = vmatpush1.msra.mxu0 0.0
      %709 = vmatprep.subr.mxu0 0.0
      %710 = vmatpush1.msra.mxu0 0.0
      %711 = vmatprep.subr.mxu0 0.0
      %712 = vmatpush1.msra.mxu0 0.0
      %713 = vmatprep.subr.mxu0 0.0
      %714 = vmatpush1.msra.mxu0 0.0
      %715 = vmatprep.subr.mxu0 0.0
      %716 = vmatpush1.msra.mxu0 0.0
      %717 = vmatprep.subr.mxu0 0.0
      %718 = vmatpush1.msra.mxu0 0.0
      %719 = vmatprep.subr.mxu0 0.0
      %720 = vmatpush1.msra.mxu0 0.0
      %721 = vmatprep.subr.mxu0 0.0
      %722 = vmatpush1.msra.mxu0 0.0
      %723 = vmatprep.subr.mxu0 0.0
      %724 = vmatpush1.msra.mxu0 0.0
      %725 = vmatprep.subr.mxu0 0.0
      %726 = vmatpush1.msra.mxu0 0.0
      %727 = vmatprep.subr.mxu0 0.0
      %728 = vmatpush1.msra.mxu0 0.0
      %729 = vmatprep.mubr.f32.mxu0 0.0
      %v730 = vand.u32 %v249, 4294901760
      %731 = vmatmul.mubr.f32.gmra.mrb[0].mxu0 %v730
      %v732 = vpop.f32.mrb[0].mxu0
      %v733 = vadd.f32 %v658, %v732
      %v734 = vpop.f32.mrb[0].mxu0
      %735 = vdwg.mxu0
      %v737 = vsel %vm247, %v237, 0
      %739 = vmatprep.subr.mxu0 0.0
      %v740 = vand.u32 %v238, 4294901760
      %741 = vmatpush1.msra.mxu0 %v740
      %742 = vmatprep.subr.mxu0 0.0
      %v743 = vand.u32 %v239, 4294901760
      %744 = vmatpush1.msra.mxu0 %v743
      %745 = vmatprep.subr.mxu0 0.0
      %v746 = vand.u32 %v240, 4294901760
      %747 = vmatpush1.msra.mxu0 %v746
      %748 = vmatprep.subr.mxu0 0.0
      %v749 = vand.u32 %v241, 4294901760
      %750 = vmatpush1.msra.mxu0 %v749
      %751 = vmatprep.subr.mxu0 0.0
      %752 = vmatpush1.msra.mxu0 0.0
      %753 = vmatprep.subr.mxu0 0.0
      %754 = vmatpush1.msra.mxu0 0.0
      %755 = vmatprep.subr.mxu0 0.0
      %756 = vmatpush1.msra.mxu0 0.0
      %757 = vmatprep.subr.mxu0 0.0
      %758 = vmatpush1.msra.mxu0 0.0
      %759 = vmatprep.subr.mxu0 0.0
      %760 = vmatpush1.msra.mxu0 0.0
      %761 = vmatprep.subr.mxu0 0.0
      %762 = vmatpush1.msra.mxu0 0.0
      %763 = vmatprep.subr.mxu0 0.0
      %764 = vmatpush1.msra.mxu0 0.0
      %765 = vmatprep.subr.mxu0 0.0
      %766 = vmatpush1.msra.mxu0 0.0
      %767 = vmatprep.subr.mxu0 0.0
      %768 = vmatpush1.msra.mxu0 0.0
      %769 = vmatprep.subr.mxu0 0.0
      %770 = vmatpush1.msra.mxu0 0.0
      %771 = vmatprep.subr.mxu0 0.0
      %772 = vmatpush1.msra.mxu0 0.0
      %773 = vmatprep.subr.mxu0 0.0
      %774 = vmatpush1.msra.mxu0 0.0
      %775 = vmatprep.subr.mxu0 0.0
      %776 = vmatpush1.msra.mxu0 0.0
      %777 = vmatprep.subr.mxu0 0.0
      %778 = vmatpush1.msra.mxu0 0.0
      %779 = vmatprep.subr.mxu0 0.0
      %780 = vmatpush1.msra.mxu0 0.0
      %781 = vmatprep.subr.mxu0 0.0
      %782 = vmatpush1.msra.mxu0 0.0
      %783 = vmatprep.subr.mxu0 0.0
      %784 = vmatpush1.msra.mxu0 0.0
      %785 = vmatprep.subr.mxu0 0.0
      %786 = vmatpush1.msra.mxu0 0.0
      %787 = vmatprep.subr.mxu0 0.0
      %788 = vmatpush1.msra.mxu0 0.0
      %789 = vmatprep.subr.mxu0 0.0
      %790 = vmatpush1.msra.mxu0 0.0
      %791 = vmatprep.subr.mxu0 0.0
      %792 = vmatpush1.msra.mxu0 0.0
      %793 = vmatprep.subr.mxu0 0.0
      %794 = vmatpush1.msra.mxu0 0.0
      %795 = vmatprep.subr.mxu0 0.0
      %796 = vmatpush1.msra.mxu0 0.0
      %797 = vmatprep.subr.mxu0 0.0
      %798 = vmatpush1.msra.mxu0 0.0
      %799 = vmatprep.subr.mxu0 0.0
      %800 = vmatpush1.msra.mxu0 0.0
      %801 = vmatprep.subr.mxu0 0.0
      %802 = vmatpush1.msra.mxu0 0.0
      %803 = vmatprep.subr.mxu0 0.0
      %804 = vmatpush1.msra.mxu0 0.0
      %805 = vmatprep.subr.mxu0 0.0
      %806 = vmatpush1.msra.mxu0 0.0
      %807 = vmatprep.mubr.f32.mxu0 0.0
      %v808 = vand.u32 %v737, 4294901760
      %v809 = vsub.f32 %v737, %v808
      %v810 = vand.u32 %v809, 4294901760
      %v811 = vsub.f32 %v809, %v810
      %v812 = vand.u32 %v811, 4294901760
      %813 = vmatmul.mubr.f32.gmra.mrb[0].mxu0 %v812
      %v814 = vpop.f32.mrb[0].mxu0
      %v815 = vadd.f32 %v733, %v814
      %v816 = vpop.f32.mrb[0].mxu0
      %817 = vdwg.mxu0
      %818 = vmatprep.subr.mxu0 0.0
      %v819 = vand.u32 %v238, 4294901760
      %v820 = vsub.f32 %v238, %v819
      %v821 = vand.u32 %v820, 4294901760
      %v822 = vsub.f32 %v820, %v821
      %v823 = vand.u32 %v822, 4294901760
      %824 = vmatpush1.msra.mxu0 %v823
      %825 = vmatprep.subr.mxu0 0.0
      %v826 = vand.u32 %v239, 4294901760
      %v827 = vsub.f32 %v239, %v826
      %v828 = vand.u32 %v827, 4294901760
      %v829 = vsub.f32 %v827, %v828
      %v830 = vand.u32 %v829, 4294901760
      %831 = vmatpush1.msra.mxu0 %v830
      %832 = vmatprep.subr.mxu0 0.0
      %v833 = vand.u32 %v240, 4294901760
      %v834 = vsub.f32 %v240, %v833
      %v835 = vand.u32 %v834, 4294901760
      %v836 = vsub.f32 %v834, %v835
      %v837 = vand.u32 %v836, 4294901760
      %838 = vmatpush1.msra.mxu0 %v837
      %839 = vmatprep.subr.mxu0 0.0
      %v840 = vand.u32 %v241, 4294901760
      %v841 = vsub.f32 %v241, %v840
      %v842 = vand.u32 %v841, 4294901760
      %v843 = vsub.f32 %v841, %v842
      %v844 = vand.u32 %v843, 4294901760
      %845 = vmatpush1.msra.mxu0 %v844
      %846 = vmatprep.subr.mxu0 0.0
      %847 = vmatpush1.msra.mxu0 0.0
      %848 = vmatprep.subr.mxu0 0.0
      %849 = vmatpush1.msra.mxu0 0.0
      %850 = vmatprep.subr.mxu0 0.0
      %851 = vmatpush1.msra.mxu0 0.0
      %852 = vmatprep.subr.mxu0 0.0
      %853 = vmatpush1.msra.mxu0 0.0
      %854 = vmatprep.subr.mxu0 0.0
      %855 = vmatpush1.msra.mxu0 0.0
      %856 = vmatprep.subr.mxu0 0.0
      %857 = vmatpush1.msra.mxu0 0.0
      %858 = vmatprep.subr.mxu0 0.0
      %859 = vmatpush1.msra.mxu0 0.0
      %860 = vmatprep.subr.mxu0 0.0
      %861 = vmatpush1.msra.mxu0 0.0
      %862 = vmatprep.subr.mxu0 0.0
      %863 = vmatpush1.msra.mxu0 0.0
      %864 = vmatprep.subr.mxu0 0.0
      %865 = vmatpush1.msra.mxu0 0.0
      %866 = vmatprep.subr.mxu0 0.0
      %867 = vmatpush1.msra.mxu0 0.0
      %868 = vmatprep.subr.mxu0 0.0
      %869 = vmatpush1.msra.mxu0 0.0
      %870 = vmatprep.subr.mxu0 0.0
      %871 = vmatpush1.msra.mxu0 0.0
      %872 = vmatprep.subr.mxu0 0.0
      %873 = vmatpush1.msra.mxu0 0.0
      %874 = vmatprep.subr.mxu0 0.0
      %875 = vmatpush1.msra.mxu0 0.0
      %876 = vmatprep.subr.mxu0 0.0
      %877 = vmatpush1.msra.mxu0 0.0
      %878 = vmatprep.subr.mxu0 0.0
      %879 = vmatpush1.msra.mxu0 0.0
      %880 = vmatprep.subr.mxu0 0.0
      %881 = vmatpush1.msra.mxu0 0.0
      %882 = vmatprep.subr.mxu0 0.0
      %883 = vmatpush1.msra.mxu0 0.0
      %884 = vmatprep.subr.mxu0 0.0
      %885 = vmatpush1.msra.mxu0 0.0
      %886 = vmatprep.subr.mxu0 0.0
      %887 = vmatpush1.msra.mxu0 0.0
      %888 = vmatprep.subr.mxu0 0.0
      %889 = vmatpush1.msra.mxu0 0.0
      %890 = vmatprep.subr.mxu0 0.0
      %891 = vmatpush1.msra.mxu0 0.0
      %892 = vmatprep.subr.mxu0 0.0
      %893 = vmatpush1.msra.mxu0 0.0
      %894 = vmatprep.subr.mxu0 0.0
      %895 = vmatpush1.msra.mxu0 0.0
      %896 = vmatprep.subr.mxu0 0.0
      %897 = vmatpush1.msra.mxu0 0.0
      %898 = vmatprep.subr.mxu0 0.0
      %899 = vmatpush1.msra.mxu0 0.0
      %900 = vmatprep.subr.mxu0 0.0
      %901 = vmatpush1.msra.mxu0 0.0
      %902 = vmatprep.mubr.f32.mxu0 0.0
      %v903 = vand.u32 %v737, 4294901760
      %904 = vmatmul.mubr.f32.gmra.mrb[0].mxu0 %v903
      %v905 = vpop.f32.mrb[0].mxu0
      %v906 = vadd.f32 %v815, %v905
      %v907 = vpop.f32.mrb[0].mxu0
      %908 = vdwg.mxu0
      %909 = vmatprep.subr.mxu0 0.0
      %v910 = vand.u32 %v238, 4294901760
      %v911 = vsub.f32 %v238, %v910
      %912 = vmatpush1.msra.mxu0 %v911
      %913 = vmatprep.subr.mxu0 0.0
      %v914 = vand.u32 %v239, 4294901760
      %v915 = vsub.f32 %v239, %v914
      %916 = vmatpush1.msra.mxu0 %v915
      %917 = vmatprep.subr.mxu0 0.0
      %v918 = vand.u32 %v240, 4294901760
      %v919 = vsub.f32 %v240, %v918
      %920 = vmatpush1.msra.mxu0 %v919
      %921 = vmatprep.subr.mxu0 0.0
      %v922 = vand.u32 %v241, 4294901760
      %v923 = vsub.f32 %v241, %v922
      %924 = vmatpush1.msra.mxu0 %v923
      %925 = vmatprep.subr.mxu0 0.0
      %926 = vmatpush1.msra.mxu0 0.0
      %927 = vmatprep.subr.mxu0 0.0
      %928 = vmatpush1.msra.mxu0 0.0
      %929 = vmatprep.subr.mxu0 0.0
      %930 = vmatpush1.msra.mxu0 0.0
      %931 = vmatprep.subr.mxu0 0.0
      %932 = vmatpush1.msra.mxu0 0.0
      %933 = vmatprep.subr.mxu0 0.0
      %934 = vmatpush1.msra.mxu0 0.0
      %935 = vmatprep.subr.mxu0 0.0
      %936 = vmatpush1.msra.mxu0 0.0
      %937 = vmatprep.subr.mxu0 0.0
      %938 = vmatpush1.msra.mxu0 0.0
      %939 = vmatprep.subr.mxu0 0.0
      %940 = vmatpush1.msra.mxu0 0.0
      %941 = vmatprep.subr.mxu0 0.0
      %942 = vmatpush1.msra.mxu0 0.0
      %943 = vmatprep.subr.mxu0 0.0
      %944 = vmatpush1.msra.mxu0 0.0
      %945 = vmatprep.subr.mxu0 0.0
      %946 = vmatpush1.msra.mxu0 0.0
      %947 = vmatprep.subr.mxu0 0.0
      %948 = vmatpush1.msra.mxu0 0.0
      %949 = vmatprep.subr.mxu0 0.0
      %950 = vmatpush1.msra.mxu0 0.0
      %951 = vmatprep.subr.mxu0 0.0
      %952 = vmatpush1.msra.mxu0 0.0
      %953 = vmatprep.subr.mxu0 0.0
      %954 = vmatpush1.msra.mxu0 0.0
      %955 = vmatprep.subr.mxu0 0.0
      %956 = vmatpush1.msra.mxu0 0.0
      %957 = vmatprep.subr.mxu0 0.0
      %958 = vmatpush1.msra.mxu0 0.0
      %959 = vmatprep.subr.mxu0 0.0
      %960 = vmatpush1.msra.mxu0 0.0
      %961 = vmatprep.subr.mxu0 0.0
      %962 = vmatpush1.msra.mxu0 0.0
      %963 = vmatprep.subr.mxu0 0.0
      %964 = vmatpush1.msra.mxu0 0.0
      %965 = vmatprep.subr.mxu0 0.0
      %966 = vmatpush1.msra.mxu0 0.0
      %967 = vmatprep.subr.mxu0 0.0
      %968 = vmatpush1.msra.mxu0 0.0
      %969 = vmatprep.subr.mxu0 0.0
      %970 = vmatpush1.msra.mxu0 0.0
      %971 = vmatprep.subr.mxu0 0.0
      %972 = vmatpush1.msra.mxu0 0.0
      %973 = vmatprep.subr.mxu0 0.0
      %974 = vmatpush1.msra.mxu0 0.0
      %975 = vmatprep.subr.mxu0 0.0
      %976 = vmatpush1.msra.mxu0 0.0
      %977 = vmatprep.subr.mxu0 0.0
      %978 = vmatpush1.msra.mxu0 0.0
      %979 = vmatprep.subr.mxu0 0.0
      %980 = vmatpush1.msra.mxu0 0.0
      %981 = vmatprep.mubr.f32.mxu0 0.0
      %v982 = vand.u32 %v737, 4294901760
      %v983 = vsub.f32 %v737, %v982
      %984 = vmatmul.mubr.f32.gmra.mrb[0].mxu0 %v983
      %v985 = vpop.f32.mrb[0].mxu0
      %v986 = vadd.f32 %v906, %v985
      %v987 = vpop.f32.mrb[0].mxu0
      %988 = vdwg.mxu0
      %989 = vmatprep.subr.mxu0 0.0
      %v990 = vand.u32 %v238, 4294901760
      %991 = vmatpush1.msra.mxu0 %v990
      %992 = vmatprep.subr.mxu0 0.0
      %v993 = vand.u32 %v239, 4294901760
      %994 = vmatpush1.msra.mxu0 %v993
      %995 = vmatprep.subr.mxu0 0.0
      %v996 = vand.u32 %v240, 4294901760
      %997 = vmatpush1.msra.mxu0 %v996
      %998 = vmatprep.subr.mxu0 0.0
      %v999 = vand.u32 %v241, 4294901760
      %1000 = vmatpush1.msra.mxu0 %v999
      %1001 = vmatprep.subr.mxu0 0.0
      %1002 = vmatpush1.msra.mxu0 0.0
      %1003 = vmatprep.subr.mxu0 0.0
      %1004 = vmatpush1.msra.mxu0 0.0
      %1005 = vmatprep.subr.mxu0 0.0
      %1006 = vmatpush1.msra.mxu0 0.0
      %1007 = vmatprep.subr.mxu0 0.0
      %1008 = vmatpush1.msra.mxu0 0.0
      %1009 = vmatprep.subr.mxu0 0.0
      %1010 = vmatpush1.msra.mxu0 0.0
      %1011 = vmatprep.subr.mxu0 0.0
      %1012 = vmatpush1.msra.mxu0 0.0
      %1013 = vmatprep.subr.mxu0 0.0
      %1014 = vmatpush1.msra.mxu0 0.0
      %1015 = vmatprep.subr.mxu0 0.0
      %1016 = vmatpush1.msra.mxu0 0.0
      %1017 = vmatprep.subr.mxu0 0.0
      %1018 = vmatpush1.msra.mxu0 0.0
      %1019 = vmatprep.subr.mxu0 0.0
      %1020 = vmatpush1.msra.mxu0 0.0
      %1021 = vmatprep.subr.mxu0 0.0
      %1022 = vmatpush1.msra.mxu0 0.0
      %1023 = vmatprep.subr.mxu0 0.0
      %1024 = vmatpush1.msra.mxu0 0.0
      %1025 = vmatprep.subr.mxu0 0.0
      %1026 = vmatpush1.msra.mxu0 0.0
      %1027 = vmatprep.subr.mxu0 0.0
      %1028 = vmatpush1.msra.mxu0 0.0
      %1029 = vmatprep.subr.mxu0 0.0
      %1030 = vmatpush1.msra.mxu0 0.0
      %1031 = vmatprep.subr.mxu0 0.0
      %1032 = vmatpush1.msra.mxu0 0.0
      %1033 = vmatprep.subr.mxu0 0.0
      %1034 = vmatpush1.msra.mxu0 0.0
      %1035 = vmatprep.subr.mxu0 0.0
      %1036 = vmatpush1.msra.mxu0 0.0
      %1037 = vmatprep.subr.mxu0 0.0
      %1038 = vmatpush1.msra.mxu0 0.0
      %1039 = vmatprep.subr.mxu0 0.0
      %1040 = vmatpush1.msra.mxu0 0.0
      %1041 = vmatprep.subr.mxu0 0.0
      %1042 = vmatpush1.msra.mxu0 0.0
      %1043 = vmatprep.subr.mxu0 0.0
      %1044 = vmatpush1.msra.mxu0 0.0
      %1045 = vmatprep.subr.mxu0 0.0
      %1046 = vmatpush1.msra.mxu0 0.0
      %1047 = vmatprep.subr.mxu0 0.0
      %1048 = vmatpush1.msra.mxu0 0.0
      %1049 = vmatprep.subr.mxu0 0.0
      %1050 = vmatpush1.msra.mxu0 0.0
      %1051 = vmatprep.subr.mxu0 0.0
      %1052 = vmatpush1.msra.mxu0 0.0
      %1053 = vmatprep.subr.mxu0 0.0
      %1054 = vmatpush1.msra.mxu0 0.0
      %1055 = vmatprep.subr.mxu0 0.0
      %1056 = vmatpush1.msra.mxu0 0.0
      %1057 = vmatprep.mubr.f32.mxu0 0.0
      %v1058 = vand.u32 %v737, 4294901760
      %v1059 = vsub.f32 %v737, %v1058
      %v1060 = vand.u32 %v1059, 4294901760
      %1061 = vmatmul.mubr.f32.gmra.mrb[0].mxu0 %v1060
      %v1062 = vpop.f32.mrb[0].mxu0
      %v1063 = vadd.f32 %v986, %v1062
      %v1064 = vpop.f32.mrb[0].mxu0
      %1065 = vdwg.mxu0
      %1066 = vmatprep.subr.mxu0 0.0
      %v1067 = vand.u32 %v238, 4294901760
      %v1068 = vsub.f32 %v238, %v1067
      %v1069 = vand.u32 %v1068, 4294901760
      %1070 = vmatpush1.msra.mxu0 %v1069
      %1071 = vmatprep.subr.mxu0 0.0
      %v1072 = vand.u32 %v239, 4294901760
      %v1073 = vsub.f32 %v239, %v1072
      %v1074 = vand.u32 %v1073, 4294901760
      %1075 = vmatpush1.msra.mxu0 %v1074
      %1076 = vmatprep.subr.mxu0 0.0
      %v1077 = vand.u32 %v240, 4294901760
      %v1078 = vsub.f32 %v240, %v1077
      %v1079 = vand.u32 %v1078, 4294901760
      %1080 = vmatpush1.msra.mxu0 %v1079
      %1081 = vmatprep.subr.mxu0 0.0
      %v1082 = vand.u32 %v241, 4294901760
      %v1083 = vsub.f32 %v241, %v1082
      %v1084 = vand.u32 %v1083, 4294901760
      %1085 = vmatpush1.msra.mxu0 %v1084
      %1086 = vmatprep.subr.mxu0 0.0
      %1087 = vmatpush1.msra.mxu0 0.0
      %1088 = vmatprep.subr.mxu0 0.0
      %1089 = vmatpush1.msra.mxu0 0.0
      %1090 = vmatprep.subr.mxu0 0.0
      %1091 = vmatpush1.msra.mxu0 0.0
      %1092 = vmatprep.subr.mxu0 0.0
      %1093 = vmatpush1.msra.mxu0 0.0
      %1094 = vmatprep.subr.mxu0 0.0
      %1095 = vmatpush1.msra.mxu0 0.0
      %1096 = vmatprep.subr.mxu0 0.0
      %1097 = vmatpush1.msra.mxu0 0.0
      %1098 = vmatprep.subr.mxu0 0.0
      %1099 = vmatpush1.msra.mxu0 0.0
      %1100 = vmatprep.subr.mxu0 0.0
      %1101 = vmatpush1.msra.mxu0 0.0
      %1102 = vmatprep.subr.mxu0 0.0
      %1103 = vmatpush1.msra.mxu0 0.0
      %1104 = vmatprep.subr.mxu0 0.0
      %1105 = vmatpush1.msra.mxu0 0.0
      %1106 = vmatprep.subr.mxu0 0.0
      %1107 = vmatpush1.msra.mxu0 0.0
      %1108 = vmatprep.subr.mxu0 0.0
      %1109 = vmatpush1.msra.mxu0 0.0
      %1110 = vmatprep.subr.mxu0 0.0
      %1111 = vmatpush1.msra.mxu0 0.0
      %1112 = vmatprep.subr.mxu0 0.0
      %1113 = vmatpush1.msra.mxu0 0.0
      %1114 = vmatprep.subr.mxu0 0.0
      %1115 = vmatpush1.msra.mxu0 0.0
      %1116 = vmatprep.subr.mxu0 0.0
      %1117 = vmatpush1.msra.mxu0 0.0
      %1118 = vmatprep.subr.mxu0 0.0
      %1119 = vmatpush1.msra.mxu0 0.0
      %1120 = vmatprep.subr.mxu0 0.0
      %1121 = vmatpush1.msra.mxu0 0.0
      %1122 = vmatprep.subr.mxu0 0.0
      %1123 = vmatpush1.msra.mxu0 0.0
      %1124 = vmatprep.subr.mxu0 0.0
      %1125 = vmatpush1.msra.mxu0 0.0
      %1126 = vmatprep.subr.mxu0 0.0
      %1127 = vmatpush1.msra.mxu0 0.0
      %1128 = vmatprep.subr.mxu0 0.0
      %1129 = vmatpush1.msra.mxu0 0.0
      %1130 = vmatprep.subr.mxu0 0.0
      %1131 = vmatpush1.msra.mxu0 0.0
      %1132 = vmatprep.subr.mxu0 0.0
      %1133 = vmatpush1.msra.mxu0 0.0
      %1134 = vmatprep.subr.mxu0 0.0
      %1135 = vmatpush1.msra.mxu0 0.0
      %1136 = vmatprep.subr.mxu0 0.0
      %1137 = vmatpush1.msra.mxu0 0.0
      %1138 = vmatprep.subr.mxu0 0.0
      %1139 = vmatpush1.msra.mxu0 0.0
      %1140 = vmatprep.subr.mxu0 0.0
      %1141 = vmatpush1.msra.mxu0 0.0
      %1142 = vmatprep.mubr.f32.mxu0 0.0
      %v1143 = vand.u32 %v737, 4294901760
      %1144 = vmatmul.mubr.f32.gmra.mrb[0].mxu0 %v1143
      %v1145 = vpop.f32.mrb[0].mxu0
      %v1146 = vadd.f32 %v1063, %v1145
      %v1147 = vpop.f32.mrb[0].mxu0
      %1148 = vdwg.mxu0
      %1149 = vmatprep.subr.mxu0 0.0
      %v1150 = vand.u32 %v238, 4294901760
      %1151 = vmatpush1.msra.mxu0 %v1150
      %1152 = vmatprep.subr.mxu0 0.0
      %v1153 = vand.u32 %v239, 4294901760
      %1154 = vmatpush1.msra.mxu0 %v1153
      %1155 = vmatprep.subr.mxu0 0.0
      %v1156 = vand.u32 %v240, 4294901760
      %1157 = vmatpush1.msra.mxu0 %v1156
      %1158 = vmatprep.subr.mxu0 0.0
      %v1159 = vand.u32 %v241, 4294901760
      %1160 = vmatpush1.msra.mxu0 %v1159
      %1161 = vmatprep.subr.mxu0 0.0
      %1162 = vmatpush1.msra.mxu0 0.0
      %1163 = vmatprep.subr.mxu0 0.0
      %1164 = vmatpush1.msra.mxu0 0.0
      %1165 = vmatprep.subr.mxu0 0.0
      %1166 = vmatpush1.msra.mxu0 0.0
      %1167 = vmatprep.subr.mxu0 0.0
      %1168 = vmatpush1.msra.mxu0 0.0
      %1169 = vmatprep.subr.mxu0 0.0
      %1170 = vmatpush1.msra.mxu0 0.0
      %1171 = vmatprep.subr.mxu0 0.0
      %1172 = vmatpush1.msra.mxu0 0.0
      %1173 = vmatprep.subr.mxu0 0.0
      %1174 = vmatpush1.msra.mxu0 0.0
      %1175 = vmatprep.subr.mxu0 0.0
      %1176 = vmatpush1.msra.mxu0 0.0
      %1177 = vmatprep.subr.mxu0 0.0
      %1178 = vmatpush1.msra.mxu0 0.0
      %1179 = vmatprep.subr.mxu0 0.0
      %1180 = vmatpush1.msra.mxu0 0.0
      %1181 = vmatprep.subr.mxu0 0.0
      %1182 = vmatpush1.msra.mxu0 0.0
      %1183 = vmatprep.subr.mxu0 0.0
      %1184 = vmatpush1.msra.mxu0 0.0
      %1185 = vmatprep.subr.mxu0 0.0
      %1186 = vmatpush1.msra.mxu0 0.0
      %1187 = vmatprep.subr.mxu0 0.0
      %1188 = vmatpush1.msra.mxu0 0.0
      %1189 = vmatprep.subr.mxu0 0.0
      %1190 = vmatpush1.msra.mxu0 0.0
      %1191 = vmatprep.subr.mxu0 0.0
      %1192 = vmatpush1.msra.mxu0 0.0
      %1193 = vmatprep.subr.mxu0 0.0
      %1194 = vmatpush1.msra.mxu0 0.0
      %1195 = vmatprep.subr.mxu0 0.0
      %1196 = vmatpush1.msra.mxu0 0.0
      %1197 = vmatprep.subr.mxu0 0.0
      %1198 = vmatpush1.msra.mxu0 0.0
      %1199 = vmatprep.subr.mxu0 0.0
      %1200 = vmatpush1.msra.mxu0 0.0
      %1201 = vmatprep.subr.mxu0 0.0
      %1202 = vmatpush1.msra.mxu0 0.0
      %1203 = vmatprep.subr.mxu0 0.0
      %1204 = vmatpush1.msra.mxu0 0.0
      %1205 = vmatprep.subr.mxu0 0.0
      %1206 = vmatpush1.msra.mxu0 0.0
      %1207 = vmatprep.subr.mxu0 0.0
      %1208 = vmatpush1.msra.mxu0 0.0
      %1209 = vmatprep.subr.mxu0 0.0
      %1210 = vmatpush1.msra.mxu0 0.0
      %1211 = vmatprep.subr.mxu0 0.0
      %1212 = vmatpush1.msra.mxu0 0.0
      %1213 = vmatprep.subr.mxu0 0.0
      %1214 = vmatpush1.msra.mxu0 0.0
      %1215 = vmatprep.subr.mxu0 0.0
      %1216 = vmatpush1.msra.mxu0 0.0
      %1217 = vmatprep.mubr.f32.mxu0 0.0
      %v1218 = vand.u32 %v737, 4294901760
      %1219 = vmatmul.mubr.f32.gmra.mrb[0].mxu0 %v1218
      %v1220 = vpop.f32.mrb[0].mxu0
      %v1221 = vadd.f32 %v1146, %v1220
      %v1222 = vpop.f32.mrb[0].mxu0
      %1223 = vdwg.mxu0
      %v1224 = vld [vmem:[%s4] sm:$0x1]
      %v1226 = vlaneseq
      %v1227 = vshrl.u32 %v1226, 7
      %v1228 = vsub.s32 0, %v1227
      %v1229 = vrot.slane %v1224, %v1228
      %v1231 = vadd.f32 %v1221, %v1229
      %1232 = vrot.lane.b32.xlu0 %v1231, 64
      %v1233 = vpop.permute.xlu0 %1232
      %v1234 = vlaneseq
      %v1235 = vand.u32 %v1234, 127
      %vm1236 = vcmp.lt.s32.totalorder %v1235, 64
      %v1237 = vsel %vm1236, %v1231, %v1233
      %v1238 = vsel %vm1236, %v1233, %v1231
      %v1239 = vmul.f32 %v1238, -30.0
      %v1240 = vmul.f32 %v1237, %v1237
      %v1241 = vmul.f32 %v1238, %v1238
      %v1242 = vadd.f32 %v1240, %v1241
      %v1243 = vmul.f32 %v1242, 100.0
      %v1244 = vsub.f32 %v1239, %v1243
      %v1245 = vmul.f32 %v1244, 1.442695
      %v1246 = vpow.pop %v1245
      %v1247 = vmul.f32 %v1237, 30.0
      %v1248 = vsel %vm1236, 1.5707964, 0.0
      %v1249 = vadd.f32 %v1247, %v1248
      %v1250 = vand.u32 2147483647, %v1249
      %vm1251 = vcmp.le.f32.partialorder %v1250, 0.7853982
      %vm1252 = vcmp.lt.s32.totalorder %v1249, 0
      %v1253 = vand.u32 %v1249, 2139095040
      %v1254 = vshrl.u32 %v1253, 23
      %v1255 = vsub.s32 %v1254, 127
      %v1256 = vand.u32 2147483647, %v1249
      %v1257 = vand.u32 %v1256, 8388607
      %v1258 = vor.u32 %v1257, 8388608
      %v1259 = vsub.s32 0, %v1258
      %v1260 = vadd.s32 %v1255, 1
      %vm1261 = vcmp.gt.s32.totalorder %v1260, 0
      %v1262 = vsel %vm1261, %v1260, 0
      %v1263 = vshrl.u32 %v1262, 5
      %v1264 = vand.u32 %v1262, 31
      %v1265 = vsub.s32 32, %v1264
      %v1266 = vshrl.u32 683565275, %v1265
      %v1267 = vshll.u32 683565275, %v1264
      %v1268 = vshrl.u32 2475754826, %v1265
      %v1269 = vor.u32 %v1267, %v1268
      %v1270 = vshll.u32 2475754826, %v1264
      %v1271 = vshrl.u32 2131351028, %v1265
      %v1272 = vor.u32 %v1270, %v1271
      %v1273 = vshll.u32 2131351028, %v1264
      %v1274 = vshrl.u32 2102212464, %v1265
      %v1275 = vor.u32 %v1273, %v1274
      %v1276 = vshll.u32 2102212464, %v1264
      %v1277 = vshrl.u32 920167782, %v1265
      %v1278 = vor.u32 %v1276, %v1277
      %v1279 = vshll.u32 920167782, %v1264
      %v1280 = vshrl.u32 1326507024, %v1265
      %v1281 = vor.u32 %v1279, %v1280
      %vm1282 = vcmp.lt.s32.totalorder %v1263, 1
      %vm1283 = vcmp.lt.s32.totalorder %v1263, 2
      %vm1284 = vcmp.lt.s32.totalorder %v1263, 3
      %vm1285 = vcmp.lt.s32.totalorder %v1263, 4
      %v1286 = vsel %vm1282, %v1266, %v1269
      %v1287 = vsel %vm1285, %v1275, 2102212464
      %v1288 = vsel %vm1284, %v1272, %v1287
      %v1289 = vsel %vm1283, %v1286, %v1288
      %v1290 = vsel %vm1282, %v1269, %v1272
      %v1291 = vsel %vm1285, %v1278, 920167782
      %v1292 = vsel %vm1284, %v1275, %v1291
      %v1293 = vsel %vm1283, %v1290, %v1292
      %v1294 = vsel %vm1282, %v1272, %v1275
      %v1295 = vsel %vm1285, %v1281, 1326507024
      %v1296 = vsel %vm1284, %v1278, %v1295
      %v1297 = vsel %vm1283, %v1294, %v1296
      %v1298 = vshll.u32 %v1258, 8
      %v1299 = vmul.u32.u64.compose %v1298, %v1297
      %v1300 = vextract.low.u32 %v1299
      %v1301 = vextract.high.u32 %v1299
      %v1302 = vmul.u32.u64.compose %v1298, %v1293
      %v1303 = vextract.low.u32 %v1302
      %v1304 = vextract.high.u32 %v1302
      %v1305 = vmul.u32 %v1298, %v1289
      %v1306 = vadd.s32 %v1301, %v1303
      %vm1307 = vc.u32 %v1301, %v1303
      %v1308 = vadd.s32 %v1304, 1
      %v1309 = vsel %vm1307, %v1308, %v1304
      %v1310 = vadd.s32 %v1305, %v1309
      %v1311 = vadd.s32 %v1310, 536870912
      %v1312 = vshrl.u32 %v1311, 30
      %v1313 = vshll.u32 %v1312, 30
      %v1314 = vsub.s32 %v1310, %v1313
      %vm1315 = vcmp.lt.s32.totalorder %v1314, 0
      %v1316 = vsub.s32 0, %v1314
      %v1317 = vsel %vm1315, %v1316, %v1314
      %v1318 = vclz %v1317
      %v1319 = vsub.s32 %v1318, 2
      %vm1320 = vcmp.gt.s32.totalorder 0, %v1319
      %v1321 = vsel %vm1320, 0, %v1319
      %v1322 = vsub.s32 32, %v1321
      %v1323 = vshll.u32 %v1314, %v1321
      %v1324 = vshrl.u32 %v1306, %v1322
      %v1325 = vor.u32 %v1323, %v1324
      %v1326 = vsub.s32 4294967266, %v1321
      %v1327 = vadd.s32 %v1326, 127
      %v1328 = vshll.u32 %v1327, 23
      %v1329 = vor.u32 4788187, %v1328
      %v1330 = vand.u32 2147483647, %v1329
      %v1332 = vcvt.s32.f32 %v1325
      %v1333 = vmul.f32 %v1332, %v1330
      %v1334 = vxor.u32 %v1333, 2147483648
      %v1335 = vsel %vm1252, %v1334, %v1333
      %v1336 = vsub.s32 4, %v1312
      %v1337 = vsel %vm1252, %v1336, %v1312
      %v1338 = vsel %vm1251, %v1249, %v1335
      %v1339 = vsel %vm1251, 0, %v1337
      %v1340 = vcosq.f32.pop %v1338
      %v1341 = vsinq.f32.pop %v1338
      %vm1342 = vweird.f32 %v1249
      %v1343 = vadd.s32 %v1339, 3
      %v1344 = vand.u32 %v1343, 3
      %vm1345 = vcmp.lt.s32.totalorder %v1344, 2
      %vm1346 = vcmp.eq.s32.totalorder %v1344, 0
      %v1347 = vxor.u32 %v1341, 2147483648
      %v1348 = vsel %vm1346, %v1340, %v1347
      %vm1349 = vcmp.eq.s32.totalorder %v1344, 2
      %v1350 = vxor.u32 %v1340, 2147483648
      %v1351 = vsel %vm1349, %v1350, %v1341
      %v1352 = vsel %vm1345, %v1348, %v1351
      %v1353 = vsel %vm1342, nan, %v1352
      %v1354 = vmul.f32 %v1246, %v1353
      %1355 = vst [vmem:[%s236] sm:$0xff] %v1354
      %p1356 = scmp.lt.s32.totalorder %s16, 1
      %s1357 = scalar_select %p1356, %s16, 1
      %s1358 = smul.addr %s1357, 8
      %s1359 = scalar_lea.vmem %s5, %s1358
      // Predicated region
      $region41: #{wire_layer.1} parent=39 // pred_check
        %p1360 = pneg %p149
      $region42: #{wire_layer.1} parent=39 // pred_check_branch
        %1362 = sbr.rel (%p1360) target = $region44
      $region43: #{wire_layer.1} parent=39 // pred_region
        _
      $region44: #{wire_layer.1} parent=39 // pred_fallthru
        _
    $region40: #{wire_layer.1} parent=5 // pred_fallthru
      _
    %p1363 = scmp.le.s32.totalorder 2, %s11
    // Predicated region
    $region45: #{wire_layer.1} parent=5 // pred_check
      %p1364 = pneg %p1363
    $region46: #{wire_layer.1} parent=5 // pred_check_branch
      %1366 = sbr.rel (%p1364) target = $region48
    $region47: #{wire_layer.1} parent=5 // pred_region
      %s1367 = ssub.s32 %s11, 2
      // Predicated region
      $region49: #{wire_layer.1} parent=47 // pred_check
        %p1368 = pneg %p155
      $region50: #{wire_layer.1} parent=47 // pred_check_branch
        %1370 = sbr.rel (%p1368) target = $region52
      $region51: #{wire_layer.1} parent=47 // pred_region
        %p1371 = scmp.lt.s32.totalorder %s17, 1
        %s1372 = scalar_select %p1371, %s17, 1
        %s1373 = smul.addr %s1372, 8
        %s1374 = scalar_lea.vmem %s5, %s1373
      $region52: #{wire_layer.1} parent=47 // pred_fallthru
        _
    $region48: #{wire_layer.1} parent=5 // pred_fallthru
      _
  $region6: #{wire_layer.1} parent=0 // loop_footer
    %s15 = sadd.s32 1, %s11
  $region7: #{wire_layer.1} parent=0 // loop_footer_branch
    %10 = sbr.rel target = $region3
  $region8: #{wire_layer.1} parent=0 // loop_exit
    _

</llo_original>
